<compile_context>
chip_gen: v5e
topology: v5e:2x2
jax: 0.10.0
libtpu: 0.0.40
codegen_flags: <defaults>
</compile_context>

<pallas_src>
import functools

import jax
import jax.numpy as jnp
from jax.experimental import pallas as pl
from jax.experimental.pallas import tpu as pltpu

LANE = 128
SUBLANE = 8


def _round_up(n, m):
    return (n + m - 1) // m * m


# ----------------------------- kernel body ---------------------------------


def _actnorm_relu(h, n_valid, need_mask):
    """actnorm (data-init path, b=logs=0) followed by ReLU.

    Two-pass centered variance (PyTorch-faithful).  Padded batch rows are
    excluded from the statistics when the batch was sublane-padded.
    """
    inv_n = 1.0 / n_valid
    if need_mask:
        row = jax.lax.broadcasted_iota(jnp.int32, h.shape, 0)
        valid = row < n_valid
        hm = jnp.where(valid, h, 0.0)
        m = jnp.sum(hm, axis=0, keepdims=True) * inv_n
        d = jnp.where(valid, h - m, 0.0)
    else:
        m = jnp.sum(h, axis=0, keepdims=True) * inv_n
        d = h - m
    v = jnp.sum(d * d, axis=0, keepdims=True) * inv_n
    logs = jnp.clip(jnp.log(1.0 / (jnp.sqrt(v) + 1e-6)) / 3.0, -5.0, 5.0)
    return jnp.maximum((h - m) * jnp.exp(logs), 0.0)


def _encoder_kernel(x_ref, w0_ref, b0_ref, wres_ref, bres_ref, wl_ref, bl_ref,
                    out_ref, h_ref, *, n_out_dim, n_valid, need_mask, use_bf16):
    mm_dtype = jnp.bfloat16 if use_bf16 else jnp.float32

    def mm(a, w):
        # MXU matmul; f32 accumulation regardless of operand dtype.
        return jnp.dot(a.astype(mm_dtype), w,
                       preferred_element_type=jnp.float32)

    step = pl.program_id(0)

    # Stage 0: first linear n_dim -> n_width into the persistent activation.
    @pl.when(step == 0)
    def _():
        h_ref[...] = mm(x_ref[...], w0_ref[...]) + b0_ref[...]

    # One residual block per grid step; wres/bres for this step are the
    # streamed (double-buffered) tiles:  h = h + linear(relu(actnorm(h))).
    h = h_ref[...]
    y = _actnorm_relu(h, n_valid, need_mask)
    h = h + (mm(y, wres_ref[0]) + bres_ref[0])
    h_ref[...] = h

    # Last stage: final actnorm + relu + linear -> lane-dense output slab.
    # exp()+1e-6 for the "std" half is applied via a lane mask so the store
    # is a single unmasked full-width vst (no sub-128 lane slicing).
    @pl.when(step == pl.num_programs(0) - 1)
    def _():
        z = _actnorm_relu(h, n_valid, need_mask)
        o = mm(z, wl_ref[...]) + bl_ref[...]
        col = jax.lax.broadcasted_iota(jnp.int32, o.shape, dimension=1)
        is_std = jnp.logical_and(col >= n_out_dim, col < 2 * n_out_dim)
        out_ref[...] = jnp.where(is_std, jnp.exp(o) + 1e-6, o)


# ----------------------------- wrapper --------------------------------------


def vae_encoder_pallas(x, params, n_out_dim, *, use_bf16=True,
                       width_align=LANE):
    """Fused VAE_encoder forward.  Returns (mean, std).

    width_align: hidden-width padding granularity.  128 gives lane-dense
    loads/stores on every generation; 256 additionally fills the 2x256 MXU of
    v6e/v7x for large widths.
    """
    w0, b0, wres, bres, wl, bl = params
    b, n_dim = x.shape
    n_width = w0.shape[1]
    n_res = wres.shape[0]
    n_out = wl.shape[1]
    assert n_out == 2 * n_out_dim
    assert n_res >= 1, "stage-major grid requires at least one residual block"

    # ---- lane/sublane-dense zero padding (pure wrapper-side plumbing) ----
    n_dim_p = max(_round_up(n_dim, LANE), LANE)
    n_w_p = max(_round_up(n_width, width_align), width_align)
    n_out_p = max(_round_up(n_out, LANE), LANE)
    b_p = max(_round_up(b, SUBLANE), SUBLANE)

    x_p = jnp.pad(x, ((0, b_p - b), (0, n_dim_p - n_dim)))
    w0_p = jnp.pad(w0, ((0, n_dim_p - n_dim), (0, n_w_p - n_width)))
    b0_p = jnp.pad(b0, ((0, 0), (0, n_w_p - n_width)))
    wres_p = jnp.pad(wres, ((0, 0), (0, n_w_p - n_width), (0, n_w_p - n_width)))
    bres_p = jnp.pad(bres, ((0, 0), (0, 0), (0, n_w_p - n_width)))
    wl_p = jnp.pad(wl, ((0, n_w_p - n_width), (0, n_out_p - n_out)))
    bl_p = jnp.pad(bl, ((0, 0), (0, n_out_p - n_out)))

    if use_bf16:
        # bf16 weights: halved weight DMA and VMEM residency; dots still
        # accumulate in f32.  Biases stay f32 (added post-accumulation).
        w0_p = w0_p.astype(jnp.bfloat16)
        wres_p = wres_p.astype(jnp.bfloat16)
        wl_p = wl_p.astype(jnp.bfloat16)

    kernel = functools.partial(
        _encoder_kernel, n_out_dim=n_out_dim, n_valid=b,
        need_mask=(b_p != b), use_bf16=use_bf16)

    wbytes = 2 if use_bf16 else 4

    # VMEM estimate: constant-block inputs + output + h scratch (resident) and
    # one streamed (Wp,Wp)+(1,Wp) tile, everything double-buffered by Pallas.
    resident = (b_p * n_dim_p * 4 + n_dim_p * n_w_p * wbytes + n_w_p * 4
                + n_w_p * n_out_p * wbytes + n_out_p * 4
                + b_p * n_out_p * 4 + b_p * n_w_p * 4)
    streamed = n_w_p * n_w_p * wbytes + n_w_p * 4
    est = 2 * (resident + streamed) + (4 << 20)

    # Generation-aware VMEM budget (v7x: 64 MiB/TC, v5e/v6e: 128 MiB), with
    # headroom left for compiler scratch.
    try:
        vmem_cap = int(pltpu.get_tpu_info().vmem_capacity_bytes)
    except Exception:
        vmem_cap = 64 * 1024 * 1024
    vmem_limit = int(min(max(est, 32 << 20), vmem_cap - (8 << 20)))

    flops = 2 * b_p * (n_dim_p * n_w_p + n_res * n_w_p * n_w_p
                       + n_w_p * n_out_p)
    transcendentals = (n_res + 1) * (b_p + 3) * n_w_p + b_p * n_out_p
    bytes_accessed = (x_p.size * 4 + w0_p.size * wbytes + b0_p.size * 4
                      + wres_p.size * wbytes + bres_p.size * 4
                      + wl_p.size * wbytes + bl_p.size * 4
                      + b_p * n_out_p * 4)

    grid_spec = pltpu.PrefetchScalarGridSpec(
        num_scalar_prefetch=0,
        grid=(n_res,),
        in_specs=[
            pl.BlockSpec((b_p, n_dim_p), lambda i: (0, 0)),        # x (step 0)
            pl.BlockSpec((n_dim_p, n_w_p), lambda i: (0, 0)),      # w0
            pl.BlockSpec((1, n_w_p), lambda i: (0, 0)),            # b0
            pl.BlockSpec((1, n_w_p, n_w_p), lambda i: (i, 0, 0)),  # wres[i] streamed
            pl.BlockSpec((1, 1, n_w_p), lambda i: (i, 0, 0)),      # bres[i] streamed
            pl.BlockSpec((n_w_p, n_out_p), lambda i: (0, 0)),      # wl (last step)
            pl.BlockSpec((1, n_out_p), lambda i: (0, 0)),          # bl
        ],
        out_specs=pl.BlockSpec((b_p, n_out_p), lambda i: (0, 0)),
        scratch_shapes=[pltpu.VMEM((b_p, n_w_p), jnp.float32)],    # persistent h
    )

    out = pl.pallas_call(
        kernel,
        out_shape=jax.ShapeDtypeStruct((b_p, n_out_p), jnp.float32),
        grid_spec=grid_spec,
        compiler_params=pltpu.CompilerParams(
            dimension_semantics=("arbitrary",),       # stage axis carries h
            vmem_limit_bytes=vmem_limit),
        cost_estimate=pl.CostEstimate(flops=flops,
                                      transcendentals=transcendentals,
                                      bytes_accessed=bytes_accessed),
    )(x_p, w0_p, b0_p, wres_p, bres_p, wl_p, bl_p)

    # Strip padding, split mean/std (layout plumbing only).
    mean = out[:b, :n_out_dim]
    std = out[:b, n_out_dim:n_out]
    return mean, std


# ------------------------ parameter construction ----------------------------


def init_params(key, n_dim, n_out_dim, n_depth, n_width):
    """Deterministic xavier-normal weights, zero biases (same shapes as NNx).

    Weights are stored pre-transposed as [in_features, out_features] so the
    kernel computes x @ W directly (PyTorch nn.Linear does x @ W.T).
    """
    n_out = 2 * n_out_dim
    layers = [n_dim] + n_depth * [n_width] + [n_out]
    keys = jax.random.split(key, len(layers) - 1)

    def xavier(k, fan_in, fan_out):
        std = (2.0 / (fan_in + fan_out)) ** 0.5
        return (std * jax.random.normal(k, (fan_in, fan_out))).astype(jnp.float32)

    w0 = xavier(keys[0], layers[0], layers[1])
    b0 = jnp.zeros((1, layers[1]), jnp.float32)
    wres = jnp.stack([xavier(keys[i], n_width, n_width)
                      for i in range(1, n_depth)])             # (n_depth-1, W, W)
    bres = jnp.zeros((n_depth - 1, 1, n_width), jnp.float32)   # (n_depth-1, 1, W)
    wl = xavier(keys[-1], layers[-2], layers[-1])
    bl = jnp.zeros((1, layers[-1]), jnp.float32)
    return w0, b0, wres, bres, wl, bl


# ------------------------ pure-JAX reference ---------------------------------


def _actnorm_relu_ref(h):
    m = jnp.mean(h, axis=0, keepdims=True)
    v = jnp.mean(jnp.square(h - m), axis=0, keepdims=True)
    logs = jnp.clip(jnp.log(1.0 / (jnp.sqrt(v) + 1e-6)) / 3.0, -5.0, 5.0)
    return jnp.maximum((h - m) * jnp.exp(logs), 0.0)


def vae_encoder_ref(x, params, n_out_dim):
    w0, b0, wres, bres, wl, bl = params
    hp = jax.lax.Precision.HIGHEST
    h = jnp.dot(x, w0, precision=hp) + b0
    for i in range(wres.shape[0]):
        y = _actnorm_relu_ref(h)
        h = h + (jnp.dot(y, wres[i], precision=hp) + bres[i])
    h = _actnorm_relu_ref(h)
    h = jnp.dot(h, wl, precision=hp) + bl
    return h[:, :n_out_dim], jnp.exp(h[:, n_out_dim:]) + 1e-6


# ----------------------------- main ------------------------------------------


if __name__ == "__main__":
    base_key = jax.random.PRNGKey(0)

    def run_case(case_idx, b, n_dim, n_out_dim, n_depth, n_width,
                 use_bf16, atol, rtol):
        key = jax.random.fold_in(base_key, case_idx)
        kx, kp = jax.random.split(key)
        x = jax.random.normal(kx, (b, n_dim), dtype=jnp.float32)
        params = init_params(kp, n_dim, n_out_dim, n_depth, n_width)

        mean, std = vae_encoder_pallas(x, params, n_out_dim, use_bf16=use_bf16)
        jax.block_until_ready((mean, std))

        mean_ref, std_ref = vae_encoder_ref(x, params, n_out_dim)
        assert mean.shape == (b, n_out_dim) and std.shape == (b, n_out_dim)
        assert jnp.allclose(mean, mean_ref, atol=atol, rtol=rtol), (
            "mean mismatch", float(jnp.max(jnp.abs(mean - mean_ref))))
        assert jnp.allclose(std, std_ref, atol=atol, rtol=rtol), (
            "std mismatch", float(jnp.max(jnp.abs(std - std_ref))))

    # f32, small shapes consistent with the module.
    run_case(0, b=8, n_dim=8, n_out_dim=4, n_depth=3, n_width=32,
             use_bf16=False, atol=5e-4, rtol=5e-4)
    # f32, deeper/wider net (more streamed residual stages), odd batch to
    # exercise the sublane-padding + masked-statistics path.
    run_case(1, b=13, n_dim=8, n_out_dim=4, n_depth=6, n_width=64,
             use_bf16=False, atol=5e-4, rtol=5e-4)
    # bf16 MXU operands with f32 accumulation (loose-tolerance smoke check).
    run_case(2, b=8, n_dim=8, n_out_dim=4, n_depth=3, n_width=32,
             use_bf16=True, atol=1e-1, rtol=1e-1)

    print("KERNEL_OK")
</pallas_src>

<mosaic_0001>
module attributes {stable_mosaic.version = 11 : i64} {
  func.func @_encoder_kernel(%arg0: i32, %arg1: memref<8x128xf32, #tpu.memory_space<vmem>>, %arg2: memref<128x128xf32, #tpu.memory_space<vmem>>, %arg3: memref<1x128xf32, #tpu.memory_space<vmem>>, %arg4: memref<1x128x128xf32, #tpu.memory_space<vmem>>, %arg5: memref<1x1x128xf32, #tpu.memory_space<vmem>>, %arg6: memref<128x128xf32, #tpu.memory_space<vmem>>, %arg7: memref<1x128xf32, #tpu.memory_space<vmem>>, %arg8: memref<8x128xf32, #tpu.memory_space<vmem>>, %arg9: memref<8x128xf32, #tpu.memory_space<vmem>>) attributes {dimension_semantics = [#tpu.dimension_semantics<arbitrary>], iteration_bounds = array<i64: 2>, scalar_prefetch = 0 : i64, scratch_operands = 1 : i64, tpu.core_type = #tpu.core_type<tc>, window_params = [{pipeline_mode = #tpu.pipeline_mode<synchronous>, transform_indices = @transform_0, window_bounds = array<i64: 8, 128>}, {pipeline_mode = #tpu.pipeline_mode<synchronous>, transform_indices = @transform_1, window_bounds = array<i64: 128, 128>}, {pipeline_mode = #tpu.pipeline_mode<synchronous>, transform_indices = @transform_2, window_bounds = array<i64: 1, 128>}, {transform_indices = @transform_3, window_bounds = array<i64: 1, 128, 128>}, {transform_indices = @transform_4, window_bounds = array<i64: 1, 1, 128>}, {pipeline_mode = #tpu.pipeline_mode<synchronous>, transform_indices = @transform_5, window_bounds = array<i64: 128, 128>}, {pipeline_mode = #tpu.pipeline_mode<synchronous>, transform_indices = @transform_6, window_bounds = array<i64: 1, 128>}, {pipeline_mode = #tpu.pipeline_mode<synchronous>, transform_indices = @transform_7, window_bounds = array<i64: 8, 128>}]} {
    %c0_i32 = arith.constant 0 : i32
    %0 = arith.cmpi eq, %arg0, %c0_i32 : i32
    %1 = arith.extui %0 : i1 to i32
    %c0_i32_0 = arith.constant 0 : i32
    %2 = arith.cmpi ne, %1, %c0_i32_0 : i32
    scf.if %2 {
      %c0_21 = arith.constant 0 : index
      %c0_22 = arith.constant 0 : index
      %46 = vector.load %arg1[%c0_21, %c0_22] : memref<8x128xf32, #tpu.memory_space<vmem>>, vector<8x128xf32>
      %c0_23 = arith.constant 0 : index
      %c0_24 = arith.constant 0 : index
      %47 = vector.load %arg2[%c0_23, %c0_24] : memref<128x128xf32, #tpu.memory_space<vmem>>, vector<128x128xf32>
      %cst_25 = arith.constant dense<0.000000e+00> : vector<8x128xf32>
      %48 = tpu.matmul %46, %47, %cst_25 {dimension_numbers = #tpu.dot_dimension_numbers<[1], [0], [0], [1], [0, 0, 1, 1], [], []>} : vector<8x128xf32>, vector<128x128xf32>, vector<8x128xf32> -> vector<8x128xf32>
      %c0_26 = arith.constant 0 : index
      %c0_27 = arith.constant 0 : index
      %49 = vector.load %arg3[%c0_26, %c0_27] : memref<1x128xf32, #tpu.memory_space<vmem>>, vector<1x128xf32>
      %50 = vector.broadcast %49 : vector<1x128xf32> to vector<8x128xf32>
      %51 = arith.addf %48, %50 : vector<8x128xf32>
      %c0_28 = arith.constant 0 : index
      %c0_29 = arith.constant 0 : index
      %52 = vector.load %arg9[%c0_28, %c0_29] : memref<8x128xf32, #tpu.memory_space<vmem>>, vector<8x128xf32>
      tpu.vector_store %arg9[%c0_28, %c0_29], %51 {strides = array<i32>} : memref<8x128xf32, #tpu.memory_space<vmem>>, vector<8x128xf32>,
    } else {
    }
    %c0 = arith.constant 0 : index
    %c0_1 = arith.constant 0 : index
    %3 = vector.load %arg9[%c0, %c0_1] : memref<8x128xf32, #tpu.memory_space<vmem>>, vector<8x128xf32>
    %cst = arith.constant dense<0.000000e+00> : vector<128xf32>
    %4 = vector.multi_reduction <add>, %3, %cst [0] : vector<8x128xf32> to vector<128xf32>
    %5 = vector.shape_cast %4 : vector<128xf32> to vector<1x128xf32>
    %cst_2 = arith.constant 1.250000e-01 : f32
    %6 = vector.broadcast %cst_2 : f32 to vector<1x128xf32>
    %7 = arith.mulf %5, %6 : vector<1x128xf32>
    %8 = vector.broadcast %7 : vector<1x128xf32> to vector<8x128xf32>
    %9 = arith.subf %3, %8 : vector<8x128xf32>
    %10 = arith.mulf %9, %9 : vector<8x128xf32>
    %cst_3 = arith.constant dense<0.000000e+00> : vector<128xf32>
    %11 = vector.multi_reduction <add>, %10, %cst_3 [0] : vector<8x128xf32> to vector<128xf32>
    %12 = vector.shape_cast %11 : vector<128xf32> to vector<1x128xf32>
    %cst_4 = arith.constant 1.250000e-01 : f32
    %13 = vector.broadcast %cst_4 : f32 to vector<1x128xf32>
    %14 = arith.mulf %12, %13 : vector<1x128xf32>
    %15 = math.sqrt %14 : vector<1x128xf32>
    %cst_5 = arith.constant 9.99999997E-7 : f32
    %16 = vector.broadcast %cst_5 : f32 to vector<1x128xf32>
    %17 = arith.addf %15, %16 : vector<1x128xf32>
    %cst_6 = arith.constant 1.000000e+00 : f32
    %18 = vector.broadcast %cst_6 : f32 to vector<1x128xf32>
    %19 = arith.divf %18, %17 : vector<1x128xf32>
    %20 = math.log %19 : vector<1x128xf32>
    %cst_7 = arith.constant 3.000000e+00 : f32
    %21 = vector.broadcast %cst_7 : f32 to vector<1x128xf32>
    %22 = arith.divf %20, %21 : vector<1x128xf32>
    %cst_8 = arith.constant -5.000000e+00 : f32
    %cst_9 = arith.constant 5.000000e+00 : f32
    %23 = vector.broadcast %cst_8 : f32 to vector<1x128xf32>
    %24 = arith.maximumf %23, %22 : vector<1x128xf32>
    %25 = vector.broadcast %cst_9 : f32 to vector<1x128xf32>
    %26 = arith.minimumf %25, %24 : vector<1x128xf32>
    %27 = vector.broadcast %7 : vector<1x128xf32> to vector<8x128xf32>
    %28 = arith.subf %3, %27 : vector<8x128xf32>
    %29 = math.exp %26 : vector<1x128xf32>
    %30 = vector.broadcast %29 : vector<1x128xf32> to vector<8x128xf32>
    %31 = arith.mulf %28, %30 : vector<8x128xf32>
    %cst_10 = arith.constant 0.000000e+00 : f32
    %32 = vector.broadcast %cst_10 : f32 to vector<8x128xf32>
    %33 = arith.maximumf %31, %32 : vector<8x128xf32>
    %c0_11 = arith.constant 0 : index
    %c0_12 = arith.constant 0 : index
    %c0_13 = arith.constant 0 : index
    %34 = vector.load %arg4[%c0_11, %c0_12, %c0_13] : memref<1x128x128xf32, #tpu.memory_space<vmem>>, vector<1x128x128xf32>
    %35 = vector.shape_cast %34 : vector<1x128x128xf32> to vector<128x128xf32>
    %cst_14 = arith.constant dense<0.000000e+00> : vector<8x128xf32>
    %36 = tpu.matmul %33, %35, %cst_14 {dimension_numbers = #tpu.dot_dimension_numbers<[1], [0], [0], [1], [0, 0, 1, 1], [], []>} : vector<8x128xf32>, vector<128x128xf32>, vector<8x128xf32> -> vector<8x128xf32>
    %c0_15 = arith.constant 0 : index
    %c0_16 = arith.constant 0 : index
    %c0_17 = arith.constant 0 : index
    %37 = vector.load %arg5[%c0_15, %c0_16, %c0_17] : memref<1x1x128xf32, #tpu.memory_space<vmem>>, vector<1x1x128xf32>
    %38 = vector.shape_cast %37 : vector<1x1x128xf32> to vector<1x128xf32>
    %39 = vector.broadcast %38 : vector<1x128xf32> to vector<8x128xf32>
    %40 = arith.addf %36, %39 : vector<8x128xf32>
    %41 = arith.addf %3, %40 : vector<8x128xf32>
    %c0_18 = arith.constant 0 : index
    %c0_19 = arith.constant 0 : index
    %42 = vector.load %arg9[%c0_18, %c0_19] : memref<8x128xf32, #tpu.memory_space<vmem>>, vector<8x128xf32>
    tpu.vector_store %arg9[%c0_18, %c0_19], %41 {strides = array<i32>} : memref<8x128xf32, #tpu.memory_space<vmem>>, vector<8x128xf32>,
    %c1_i32 = arith.constant 1 : i32
    %43 = arith.cmpi eq, %arg0, %c1_i32 : i32
    %44 = arith.extui %43 : i1 to i32
    %c0_i32_20 = arith.constant 0 : i32
    %45 = arith.cmpi ne, %44, %c0_i32_20 : i32
    scf.if %45 {
      %cst_21 = arith.constant dense<0.000000e+00> : vector<128xf32>
      %46 = vector.multi_reduction <add>, %41, %cst_21 [0] : vector<8x128xf32> to vector<128xf32>
      %47 = vector.shape_cast %46 : vector<128xf32> to vector<1x128xf32>
      %cst_22 = arith.constant 1.250000e-01 : f32
      %48 = vector.broadcast %cst_22 : f32 to vector<1x128xf32>
      %49 = arith.mulf %47, %48 : vector<1x128xf32>
      %50 = vector.broadcast %49 : vector<1x128xf32> to vector<8x128xf32>
      %51 = arith.subf %41, %50 : vector<8x128xf32>
      %52 = arith.mulf %51, %51 : vector<8x128xf32>
      %cst_23 = arith.constant dense<0.000000e+00> : vector<128xf32>
      %53 = vector.multi_reduction <add>, %52, %cst_23 [0] : vector<8x128xf32> to vector<128xf32>
      %54 = vector.shape_cast %53 : vector<128xf32> to vector<1x128xf32>
      %cst_24 = arith.constant 1.250000e-01 : f32
      %55 = vector.broadcast %cst_24 : f32 to vector<1x128xf32>
      %56 = arith.mulf %54, %55 : vector<1x128xf32>
      %57 = math.sqrt %56 : vector<1x128xf32>
      %cst_25 = arith.constant 9.99999997E-7 : f32
      %58 = vector.broadcast %cst_25 : f32 to vector<1x128xf32>
      %59 = arith.addf %57, %58 : vector<1x128xf32>
      %cst_26 = arith.constant 1.000000e+00 : f32
      %60 = vector.broadcast %cst_26 : f32 to vector<1x128xf32>
      %61 = arith.divf %60, %59 : vector<1x128xf32>
      %62 = math.log %61 : vector<1x128xf32>
      %cst_27 = arith.constant 3.000000e+00 : f32
      %63 = vector.broadcast %cst_27 : f32 to vector<1x128xf32>
      %64 = arith.divf %62, %63 : vector<1x128xf32>
      %cst_28 = arith.constant -5.000000e+00 : f32
      %cst_29 = arith.constant 5.000000e+00 : f32
      %65 = vector.broadcast %cst_28 : f32 to vector<1x128xf32>
      %66 = arith.maximumf %65, %64 : vector<1x128xf32>
      %67 = vector.broadcast %cst_29 : f32 to vector<1x128xf32>
      %68 = arith.minimumf %67, %66 : vector<1x128xf32>
      %69 = vector.broadcast %49 : vector<1x128xf32> to vector<8x128xf32>
      %70 = arith.subf %41, %69 : vector<8x128xf32>
      %71 = math.exp %68 : vector<1x128xf32>
      %72 = vector.broadcast %71 : vector<1x128xf32> to vector<8x128xf32>
      %73 = arith.mulf %70, %72 : vector<8x128xf32>
      %cst_30 = arith.constant 0.000000e+00 : f32
      %74 = vector.broadcast %cst_30 : f32 to vector<8x128xf32>
      %75 = arith.maximumf %73, %74 : vector<8x128xf32>
      %c0_31 = arith.constant 0 : index
      %c0_32 = arith.constant 0 : index
      %76 = vector.load %arg6[%c0_31, %c0_32] : memref<128x128xf32, #tpu.memory_space<vmem>>, vector<128x128xf32>
      %cst_33 = arith.constant dense<0.000000e+00> : vector<8x128xf32>
      %77 = tpu.matmul %75, %76, %cst_33 {dimension_numbers = #tpu.dot_dimension_numbers<[1], [0], [0], [1], [0, 0, 1, 1], [], []>} : vector<8x128xf32>, vector<128x128xf32>, vector<8x128xf32> -> vector<8x128xf32>
      %c0_34 = arith.constant 0 : index
      %c0_35 = arith.constant 0 : index
      %78 = vector.load %arg7[%c0_34, %c0_35] : memref<1x128xf32, #tpu.memory_space<vmem>>, vector<1x128xf32>
      %79 = vector.broadcast %78 : vector<1x128xf32> to vector<8x128xf32>
      %80 = arith.addf %77, %79 : vector<8x128xf32>
      %81 = tpu.iota {dimensions = array<i32: 1>} : vector<8x128xi32>
      %c4_i32 = arith.constant 4 : i32
      %82 = vector.broadcast %c4_i32 : i32 to vector<8x128xi32>
      %83 = arith.cmpi sge, %81, %82 : vector<8x128xi32>
      %c8_i32 = arith.constant 8 : i32
      %84 = vector.broadcast %c8_i32 : i32 to vector<8x128xi32>
      %85 = arith.cmpi slt, %81, %84 : vector<8x128xi32>
      %86 = arith.andi %83, %85 : vector<8x128xi1>
      %87 = math.exp %80 : vector<8x128xf32>
      %cst_36 = arith.constant 9.99999997E-7 : f32
      %88 = vector.broadcast %cst_36 : f32 to vector<8x128xf32>
      %89 = arith.addf %87, %88 : vector<8x128xf32>
      %90 = arith.select %86, %89, %80 : vector<8x128xi1>, vector<8x128xf32>
      %c0_37 = arith.constant 0 : index
      %c0_38 = arith.constant 0 : index
      %91 = vector.load %arg8[%c0_37, %c0_38] : memref<8x128xf32, #tpu.memory_space<vmem>>, vector<8x128xf32>
      tpu.vector_store %arg8[%c0_37, %c0_38], %90 {strides = array<i32>} : memref<8x128xf32, #tpu.memory_space<vmem>>, vector<8x128xf32>,
    } else {
    }
    return
  }
  func.func @transform_0(%arg0: i32) -> (i32, i32) {
    %c0_i32 = arith.constant 0 : i32
    %c0_i32_0 = arith.constant 0 : i32
    %c0_i32_1 = arith.constant 0 : i32
    return %c0_i32, %c0_i32_0 : i32, i32
  }
  func.func @transform_1(%arg0: i32) -> (i32, i32) {
    %c0_i32 = arith.constant 0 : i32
    %c0_i32_0 = arith.constant 0 : i32
    %c0_i32_1 = arith.constant 0 : i32
    return %c0_i32, %c0_i32_0 : i32, i32
  }
  func.func @transform_2(%arg0: i32) -> (i32, i32) {
    %c0_i32 = arith.constant 0 : i32
    %c0_i32_0 = arith.constant 0 : i32
    %c0_i32_1 = arith.constant 0 : i32
    return %c0_i32, %c0_i32_0 : i32, i32
  }
  func.func @transform_3(%arg0: i32) -> (i32, i32, i32) {
    %c0_i32 = arith.constant 0 : i32
    %c0_i32_0 = arith.constant 0 : i32
    %c0_i32_1 = arith.constant 0 : i32
    return %arg0, %c0_i32, %c0_i32_0 : i32, i32, i32
  }
  func.func @transform_4(%arg0: i32) -> (i32, i32, i32) {
    %c0_i32 = arith.constant 0 : i32
    %c0_i32_0 = arith.constant 0 : i32
    %c0_i32_1 = arith.constant 0 : i32
    return %arg0, %c0_i32, %c0_i32_0 : i32, i32, i32
  }
  func.func @transform_5(%arg0: i32) -> (i32, i32) {
    %c0_i32 = arith.constant 0 : i32
    %c0_i32_0 = arith.constant 0 : i32
    %c0_i32_1 = arith.constant 0 : i32
    return %c0_i32, %c0_i32_0 : i32, i32
  }
  func.func @transform_6(%arg0: i32) -> (i32, i32) {
    %c0_i32 = arith.constant 0 : i32
    %c0_i32_0 = arith.constant 0 : i32
    %c0_i32_1 = arith.constant 0 : i32
    return %c0_i32, %c0_i32_0 : i32, i32
  }
  func.func @transform_7(%arg0: i32) -> (i32, i32) {
    %c0_i32 = arith.constant 0 : i32
    %c0_i32_0 = arith.constant 0 : i32
    %c0_i32_1 = arith.constant 0 : i32
    return %c0_i32, %c0_i32_0 : i32, i32
  }
}

</mosaic_0001>

<llo_original>
// kernel: tpu_custom_call.1
$region0: #{tpu_custom_call.1}
  #allocation0 [shape = 'u32[]', space=smem, size = 0x4, offset = 0x4, fixed_abs, tag = 'smem constant byte address 0x4 - core index']
  #allocation1 [shape = 'u32[72,128]{1,0:T(1,128)}', space=vmem, size = 0x9000, scoped, tag = 'internal scratch']
  #allocation2 [shape = 'f32[8,128]{1,0:T(8,128)}', space=vmem, size = 0x1000, scoped, tag = 'scratch operand']
  %s0 = inlined_call_operand.hbm [shape: f32[8,128], index: 0, kind: input, shape index: {}]
  %s1 = inlined_call_operand.hbm [shape: f32[128,128], index: 1, kind: input, shape index: {}]
  %s2 = inlined_call_operand.vmem [shape: f32[1,128], index: 2, kind: input, shape index: {}]
  %s3 = inlined_call_operand.hbm [shape: f32[2,128,128], index: 3, kind: input, shape index: {}]
  %s4 = inlined_call_operand.vmem [shape: f32[2,1,128], index: 4, kind: input, shape index: {}]
  %s5 = inlined_call_operand.hbm [shape: f32[128,128], index: 5, kind: input, shape index: {}]
  %s6 = inlined_call_operand.vmem [shape: f32[1,128], index: 6, kind: input, shape index: {}]
  %s7 = inlined_call_operand.hbm [shape: f32[8,128], index: 7, kind: output, shape index: {}]
  %s8 = sld [smem:[#allocation0]]
  $region85: #{tpu_custom_call.1} parent=0
    _
  %s10 = ssub.s32 1, %s8
  %s11 = scalar_select 0, %s10, %s8
  $region1: #{tpu_custom_call.1} parent=0
    #allocation3 [shape = 'u8[4096]{0}', space=vmem, size = 0x1000, scoped, tag = 'input window, operand 0, single buffered']
    #allocation4 [shape = 's32[2]{0}', space=sflag, size = 0x8, scoped, tag = 'scoped memory for tpu_custom_call.1']
    #allocation5 [shape = 's32[2]{0}', space=sflag, size = 0x8, scoped, tag = 'scoped memory for tpu_custom_call.1']
    #allocation6 [shape = 'u8[65536]{0}', space=vmem, size = 0x10000, scoped, tag = 'input window, operand 1, single buffered']
    #allocation7 [shape = 's32[1]{0}', space=sflag, size = 0x4, scoped, tag = 'scoped memory for tpu_custom_call.1']
    #allocation8 [shape = 'u8[131072]{0}', space=vmem, size = 0x20000, scoped, tag = 'input window, operand 3']
    #allocation9 [shape = 'u8[65536]{0}', space=vmem, size = 0x10000, scoped, tag = 'input window, operand 5, single buffered']
    #allocation10 [shape = 'u8[4096]{0}', space=vmem, size = 0x1000, scoped, tag = 'output window, operand 0, single buffered']
    %12 = vsyncpa [#allocation4], 0
    %13 = vsyncpa [#allocation7], 0
    %14 = vsyncpa [#allocation5], 0
    loop: start=0, step=1, limit=4
    $region2: #{tpu_custom_call.1} parent=1 // loop_pre_header
      _
    $region3: #{tpu_custom_call.1} parent=1 // loop_header
      %s16 = sphi 0, %s20
      %p17 = scmp.ge.s32.totalorder %s16, 4
      %s24 = sphi 0, %s24
      %s26 = sphi 0, %s24
      %s27 = sphi 0, %s26
      %s41 = sphi 0, %s27
      %s45 = sphi 0, %s45
      %s47 = sphi 0, %s45
      %s48 = sphi 0, %s47
      %s62 = sphi 0, %s48
      %s66 = sphi 0, %s66
      %s68 = sphi 0, %s66
      %s69 = sphi 0, %s68
      %s83 = sphi 0, %s69
      %s89 = sphi 0, %s91
      %s92 = sphi 0, %s89
      %s93 = sphi 0, %s92
      %s109 = sphi 0, %s93
      %s115 = sphi 0, %s117
      %s118 = sphi 0, %s115
      %s119 = sphi 0, %s118
      %s135 = sphi 0, %s119
      %s139 = sphi 0, %s139
      %s141 = sphi 0, %s139
      %s142 = sphi 0, %s141
      %s156 = sphi 0, %s142
      %s160 = sphi 0, %s160
      %s162 = sphi 0, %s160
      %s163 = sphi 0, %s162
      %s177 = sphi 0, %s163
      %s181 = sphi 0, %s181
      %s183 = sphi 0, %s181
      %s184 = sphi 0, %s183
      %s198 = sphi 0, %s184
    $region4: #{tpu_custom_call.1} parent=1 // loop_header_branch
      %19 = sbr.rel (%p17) target = $region8
    $region5: #{tpu_custom_call.1} parent=1 // loop_body
      %s21 = ssub.s32 %s16, 1
      %s22 = ssub.s32 %s16, 2
      %s23 = sadd.s32 %s16, 1
      %s25 = sadd.s32 %s24, 1
      %p28 = scmp.eq.s32.totalorder %s16, 1
      %p29 = scmp.ne.s32.totalorder %s24, %s26
      %p30 = scmp.eq.s32.totalorder %s16, 0
      %p31 = por %p29, %p30
      %p32 = scmp.ne.s32.totalorder %s24, %s26
      %p33 = scmp.eq.s32.totalorder %s21, 1
      %p34 = por %p32, %p33
      %p35 = scmp.ne.s32.totalorder %s26, %s27
      %p36 = scmp.eq.s32.totalorder %s21, 0
      %p37 = por %p35, %p36
      %p38 = scmp.ne.s32.totalorder %s26, %s27
      %p39 = scmp.eq.s32.totalorder %s22, 1
      %p40 = por %p38, %p39
      %p42 = scmp.ne.s32.totalorder %s27, %s41
      %p43 = scmp.eq.s32.totalorder %s22, 0
      %p44 = por %p42, %p43
      %s46 = sadd.s32 %s45, 1
      %p49 = scmp.eq.s32.totalorder %s16, 1
      %p50 = scmp.ne.s32.totalorder %s45, %s47
      %p51 = scmp.eq.s32.totalorder %s16, 0
      %p52 = por %p50, %p51
      %p53 = scmp.ne.s32.totalorder %s45, %s47
      %p54 = scmp.eq.s32.totalorder %s21, 1
      %p55 = por %p53, %p54
      %p56 = scmp.ne.s32.totalorder %s47, %s48
      %p57 = scmp.eq.s32.totalorder %s21, 0
      %p58 = por %p56, %p57
      %p59 = scmp.ne.s32.totalorder %s47, %s48
      %p60 = scmp.eq.s32.totalorder %s22, 1
      %p61 = por %p59, %p60
      %p63 = scmp.ne.s32.totalorder %s48, %s62
      %p64 = scmp.eq.s32.totalorder %s22, 0
      %p65 = por %p63, %p64
      %s67 = sadd.s32 %s66, 1
      %p70 = scmp.eq.s32.totalorder %s16, 1
      %p71 = scmp.ne.s32.totalorder %s66, %s68
      %p72 = scmp.eq.s32.totalorder %s16, 0
      %p73 = por %p71, %p72
      %p74 = scmp.ne.s32.totalorder %s66, %s68
      %p75 = scmp.eq.s32.totalorder %s21, 1
      %p76 = por %p74, %p75
      %p77 = scmp.ne.s32.totalorder %s68, %s69
      %p78 = scmp.eq.s32.totalorder %s21, 0
      %p79 = por %p77, %p78
      %p80 = scmp.ne.s32.totalorder %s68, %s69
      %p81 = scmp.eq.s32.totalorder %s22, 1
      %p82 = por %p80, %p81
      %p84 = scmp.ne.s32.totalorder %s69, %s83
      %p85 = scmp.eq.s32.totalorder %s22, 0
      %p86 = por %p84, %p85
      %s87 = ssub.s32 %s16, %s23
      %p88 = scmp.eq.s32.totalorder %s87, 0
      %s90 = sadd.s32 %s89, 1
      %s91 = scalar_select %p88, %s89, %s90
      %p94 = pneg %p88
      %p95 = scmp.eq.s32.totalorder %s16, 1
      %p96 = por %p94, %p95
      %p97 = scmp.ne.s32.totalorder %s89, %s92
      %p98 = scmp.eq.s32.totalorder %s16, 0
      %p99 = por %p97, %p98
      %p100 = scmp.ne.s32.totalorder %s89, %s92
      %p101 = scmp.eq.s32.totalorder %s21, 1
      %p102 = por %p100, %p101
      %p103 = scmp.ne.s32.totalorder %s92, %s93
      %p104 = scmp.eq.s32.totalorder %s21, 0
      %p105 = por %p103, %p104
      %p106 = scmp.ne.s32.totalorder %s92, %s93
      %p107 = scmp.eq.s32.totalorder %s22, 1
      %p108 = por %p106, %p107
      %p110 = scmp.ne.s32.totalorder %s93, %s109
      %p111 = scmp.eq.s32.totalorder %s22, 0
      %p112 = por %p110, %p111
      %s113 = ssub.s32 %s16, %s23
      %p114 = scmp.eq.s32.totalorder %s113, 0
      %s116 = sadd.s32 %s115, 1
      %s117 = scalar_select %p114, %s115, %s116
      %p120 = pneg %p114
      %p121 = scmp.eq.s32.totalorder %s16, 1
      %p122 = por %p120, %p121
      %p123 = scmp.ne.s32.totalorder %s115, %s118
      %p124 = scmp.eq.s32.totalorder %s16, 0
      %p125 = por %p123, %p124
      %p126 = scmp.ne.s32.totalorder %s115, %s118
      %p127 = scmp.eq.s32.totalorder %s21, 1
      %p128 = por %p126, %p127
      %p129 = scmp.ne.s32.totalorder %s118, %s119
      %p130 = scmp.eq.s32.totalorder %s21, 0
      %p131 = por %p129, %p130
      %p132 = scmp.ne.s32.totalorder %s118, %s119
      %p133 = scmp.eq.s32.totalorder %s22, 1
      %p134 = por %p132, %p133
      %p136 = scmp.ne.s32.totalorder %s119, %s135
      %p137 = scmp.eq.s32.totalorder %s22, 0
      %p138 = por %p136, %p137
      %s140 = sadd.s32 %s139, 1
      %p143 = scmp.eq.s32.totalorder %s16, 1
      %p144 = scmp.ne.s32.totalorder %s139, %s141
      %p145 = scmp.eq.s32.totalorder %s16, 0
      %p146 = por %p144, %p145
      %p147 = scmp.ne.s32.totalorder %s139, %s141
      %p148 = scmp.eq.s32.totalorder %s21, 1
      %p149 = por %p147, %p148
      %p150 = scmp.ne.s32.totalorder %s141, %s142
      %p151 = scmp.eq.s32.totalorder %s21, 0
      %p152 = por %p150, %p151
      %p153 = scmp.ne.s32.totalorder %s141, %s142
      %p154 = scmp.eq.s32.totalorder %s22, 1
      %p155 = por %p153, %p154
      %p157 = scmp.ne.s32.totalorder %s142, %s156
      %p158 = scmp.eq.s32.totalorder %s22, 0
      %p159 = por %p157, %p158
      %s161 = sadd.s32 %s160, 1
      %p164 = scmp.eq.s32.totalorder %s16, 1
      %p165 = scmp.ne.s32.totalorder %s160, %s162
      %p166 = scmp.eq.s32.totalorder %s16, 0
      %p167 = por %p165, %p166
      %p168 = scmp.ne.s32.totalorder %s160, %s162
      %p169 = scmp.eq.s32.totalorder %s21, 1
      %p170 = por %p168, %p169
      %p171 = scmp.ne.s32.totalorder %s162, %s163
      %p172 = scmp.eq.s32.totalorder %s21, 0
      %p173 = por %p171, %p172
      %p174 = scmp.ne.s32.totalorder %s162, %s163
      %p175 = scmp.eq.s32.totalorder %s22, 1
      %p176 = por %p174, %p175
      %p178 = scmp.ne.s32.totalorder %s163, %s177
      %p179 = scmp.eq.s32.totalorder %s22, 0
      %p180 = por %p178, %p179
      %s182 = sadd.s32 %s181, 1
      %p185 = scmp.eq.s32.totalorder %s16, 1
      %p186 = scmp.ne.s32.totalorder %s181, %s183
      %p187 = scmp.eq.s32.totalorder %s16, 0
      %p188 = por %p186, %p187
      %p189 = scmp.ne.s32.totalorder %s181, %s183
      %p190 = scmp.eq.s32.totalorder %s21, 1
      %p191 = por %p189, %p190
      %p192 = scmp.ne.s32.totalorder %s183, %s184
      %p193 = scmp.eq.s32.totalorder %s21, 0
      %p194 = por %p192, %p193
      %p195 = scmp.ne.s32.totalorder %s183, %s184
      %p196 = scmp.eq.s32.totalorder %s22, 1
      %p197 = por %p195, %p196
      %p199 = scmp.ne.s32.totalorder %s184, %s198
      %p200 = scmp.eq.s32.totalorder %s22, 0
      %p201 = por %p199, %p200
      %p202 = scmp.le.s32.totalorder 1, %s16
      %p203 = scmp.lt.s32.totalorder %s16, 3
      %p204 = pnand %p202, %p203
      %p205 = pneg %p204
      // Predicated region
      $region9: #{tpu_custom_call.1} parent=5 // pred_check
        _
      $region10: #{tpu_custom_call.1} parent=5 // pred_check_branch
        %207 = sbr.rel (%p204) target = $region12
      $region11: #{tpu_custom_call.1} parent=5 // pred_region
        %s208 = ssub.s32 %s16, 1
        // Predicated region
        $region13: #{tpu_custom_call.1} parent=11 // pred_check
          %p209 = pneg %p37
        $region14: #{tpu_custom_call.1} parent=11 // pred_check_branch
          %211 = sbr.rel (%p209) target = $region16
        $region15: #{tpu_custom_call.1} parent=11 // pred_region
          %213 = vsyncadd [#allocation4], 0
          %s215 = sshll.u32 %s0, 4
          %s216 = int_to_ptr.hbm [resolvable:$true] %s215
          %s217 = sshll.u32 [#allocation3], 4
          %s218 = int_to_ptr.vmem [resolvable:$true] %s217
          %220 = dma.hbm_to_vmem [thread:$0]  %s216, 128, %s218, [#allocation4]
        $region16: #{tpu_custom_call.1} parent=11 // pred_fallthru
          _
        // Predicated region
        $region17: #{tpu_custom_call.1} parent=11 // pred_check
          %p221 = pneg %p58
        $region18: #{tpu_custom_call.1} parent=11 // pred_check_branch
          %223 = sbr.rel (%p221) target = $region20
        $region19: #{tpu_custom_call.1} parent=11 // pred_region
          %225 = vsyncadd [#allocation7], 0
          %s226 = sshll.u32 %s1, 4
          %s227 = int_to_ptr.hbm [resolvable:$true] %s226
          %s228 = sshll.u32 [#allocation6], 4
          %s229 = int_to_ptr.vmem [resolvable:$true] %s228
          %234 = dma.hbm_to_vmem [thread:$0]  %s227, 2048, %s229, [#allocation7], 128, 128, 8
        $region20: #{tpu_custom_call.1} parent=11 // pred_fallthru
          _
        // Predicated region
        $region21: #{tpu_custom_call.1} parent=11 // pred_check
          %p235 = pneg %p79
        $region22: #{tpu_custom_call.1} parent=11 // pred_check_branch
          %237 = sbr.rel (%p235) target = $region24
        $region23: #{tpu_custom_call.1} parent=11 // pred_region
          _
        $region24: #{tpu_custom_call.1} parent=11 // pred_fallthru
          _
        // Predicated region
        $region25: #{tpu_custom_call.1} parent=11 // pred_check
          %p238 = pneg %p152
        $region26: #{tpu_custom_call.1} parent=11 // pred_check_branch
          %240 = sbr.rel (%p238) target = $region28
        $region27: #{tpu_custom_call.1} parent=11 // pred_region
          %242 = vsyncadd [#allocation7], 0
          %s243 = sshll.u32 %s5, 4
          %s244 = int_to_ptr.hbm [resolvable:$true] %s243
          %s245 = sshll.u32 [#allocation9], 4
          %s246 = int_to_ptr.vmem [resolvable:$true] %s245
          %251 = dma.hbm_to_vmem [thread:$0]  %s244, 2048, %s246, [#allocation7], 128, 128, 8
        $region28: #{tpu_custom_call.1} parent=11 // pred_fallthru
          _
        // Predicated region
        $region29: #{tpu_custom_call.1} parent=11 // pred_check
          %p252 = pneg %p173
        $region30: #{tpu_custom_call.1} parent=11 // pred_check_branch
          %254 = sbr.rel (%p252) target = $region32
        $region31: #{tpu_custom_call.1} parent=11 // pred_region
          _
        $region32: #{tpu_custom_call.1} parent=11 // pred_fallthru
          _
      $region12: #{tpu_custom_call.1} parent=5 // pred_fallthru
        _
      %p255 = scmp.lt.s32.totalorder %s16, 2
      // Predicated region
      $region33: #{tpu_custom_call.1} parent=5 // pred_check
        %p256 = pneg %p255
      $region34: #{tpu_custom_call.1} parent=5 // pred_check_branch
        %258 = sbr.rel (%p256) target = $region36
      $region35: #{tpu_custom_call.1} parent=5 // pred_region
        // Predicated region
        $region37: #{tpu_custom_call.1} parent=35 // pred_check
          %p259 = pneg %p99
        $region38: #{tpu_custom_call.1} parent=35 // pred_check_branch
          %261 = sbr.rel (%p259) target = $region40
        $region39: #{tpu_custom_call.1} parent=35 // pred_region
          %s262 = sand.u32 %s16, 1
          %s263 = scalar_lea.sflag [#allocation4], %s262
          %s264 = sand.u32 %s89, 1
          %s265 = smul.addr %s264, 128
          %s266 = scalar_lea.vmem [#allocation8], %s265
          %268 = vsyncadd %s263, 0
          %s269 = smul.addr %s16, 16
          %s270 = smul.addr %s269, 8
          %s271 = scalar_lea.hbm %s3, %s270
          %s272 = sshll.u32 %s271, 4
          %s273 = int_to_ptr.hbm [resolvable:$true] %s272
          %s274 = sshll.u32 %s266, 4
          %s275 = int_to_ptr.vmem [resolvable:$true] %s274
          %280 = dma.hbm_to_vmem [thread:$0]  %s273, 2048, %s275, %s263, 128, 128, 8
        $region40: #{tpu_custom_call.1} parent=35 // pred_fallthru
          _
        // Predicated region
        $region41: #{tpu_custom_call.1} parent=35 // pred_check
          %p281 = pneg %p125
        $region42: #{tpu_custom_call.1} parent=35 // pred_check_branch
          %283 = sbr.rel (%p281) target = $region44
        $region43: #{tpu_custom_call.1} parent=35 // pred_region
          %p284 = scmp.lt.s32.totalorder %s16, 1
          %s285 = scalar_select %p284, %s16, 1
          %s286 = scalar_lea.vmem %s4, %s285
        $region44: #{tpu_custom_call.1} parent=35 // pred_fallthru
          _
      $region36: #{tpu_custom_call.1} parent=5 // pred_fallthru
        _
      %p287 = scmp.le.s32.totalorder 1, %s16
      %p288 = scmp.lt.s32.totalorder %s16, 3
      %p289 = pnand %p287, %p288
      %p290 = pneg %p289
      // Predicated region
      $region45: #{tpu_custom_call.1} parent=5 // pred_check
        _
      $region46: #{tpu_custom_call.1} parent=5 // pred_check_branch
        %292 = sbr.rel (%p289) target = $region48
      $region47: #{tpu_custom_call.1} parent=5 // pred_region
        %s293 = ssub.s32 %s16, 1
        // Predicated region
        $region49: #{tpu_custom_call.1} parent=47 // pred_check
          %p294 = pneg %p37
        $region50: #{tpu_custom_call.1} parent=47 // pred_check_branch
          %296 = sbr.rel (%p294) target = $region52
        $region51: #{tpu_custom_call.1} parent=47 // pred_region
          %298 = dma.done [#allocation4], 128
        $region52: #{tpu_custom_call.1} parent=47 // pred_fallthru
          _
        // Predicated region
        $region53: #{tpu_custom_call.1} parent=47 // pred_check
          %p299 = pneg %p58
        $region54: #{tpu_custom_call.1} parent=47 // pred_check_branch
          %301 = sbr.rel (%p299) target = $region56
        $region55: #{tpu_custom_call.1} parent=47 // pred_region
          %303 = dma.done [#allocation7], 2048
        $region56: #{tpu_custom_call.1} parent=47 // pred_fallthru
          _
        %s304 = sand.u32 %s21, 1
        %s305 = scalar_lea.sflag [#allocation4], %s304
        %s306 = sand.u32 %s92, 1
        %s307 = smul.addr %s306, 128
        %s308 = scalar_lea.vmem [#allocation8], %s307
        // Predicated region
        $region57: #{tpu_custom_call.1} parent=47 // pred_check
          %p309 = pneg %p105
        $region58: #{tpu_custom_call.1} parent=47 // pred_check_branch
          %311 = sbr.rel (%p309) target = $region60
        $region59: #{tpu_custom_call.1} parent=47 // pred_region
          %313 = dma.done %s305, 2048
        $region60: #{tpu_custom_call.1} parent=47 // pred_fallthru
          _
        // Predicated region
        $region61: #{tpu_custom_call.1} parent=47 // pred_check
          %p314 = pneg %p152
        $region62: #{tpu_custom_call.1} parent=47 // pred_check_branch
          %316 = sbr.rel (%p314) target = $region64
        $region63: #{tpu_custom_call.1} parent=47 // pred_region
          %318 = dma.done [#allocation7], 2048
        $region64: #{tpu_custom_call.1} parent=47 // pred_fallthru
          _
        %p319 = pneg %p37
        %p320 = pneg %p34
        %p321 = pneg %p58
        %p322 = pneg %p55
        %p323 = pneg %p79
        %p324 = pneg %p76
        %s325 = sand.u32 %s21, 1
        %s326 = scalar_lea.sflag [#allocation4], %s325
        %s327 = sand.u32 %s92, 1
        %s328 = smul.addr %s327, 128
        %s329 = scalar_lea.vmem [#allocation8], %s328
        %p330 = pneg %p105
        %p331 = pneg %p102
        %p332 = scmp.lt.s32.totalorder %s21, 1
        %s333 = scalar_select %p332, %s21, 1
        %s334 = scalar_lea.vmem %s4, %s333
        %p335 = pneg %p131
        %p336 = pneg %p128
        %p337 = pneg %p152
        %p338 = pneg %p149
        %p339 = pneg %p173
        %p340 = pneg %p170
        %p341 = pneg %p194
        %p342 = pneg %p191
        %p343 = scmp.lt.s32.totalorder %s21, 1
        %s344 = scalar_select %p343, %s21, 1
        %s345 = scalar_lea.vmem %s4, %s344
        %p346 = scmp.eq.s32.totalorder %s21, 0
        // Predicated region
        $region65: #{tpu_custom_call.1} parent=47 // pred_check
          %p347 = pneg %p346
        $region66: #{tpu_custom_call.1} parent=47 // pred_check_branch
          %349 = sbr.rel (%p347) target = $region68
        $region67: #{tpu_custom_call.1} parent=47 // pred_region
          %v350 = vld [vmem:[#allocation3] sm:$0xff]
          %v351 = vld [vmem:[#allocation6] sm:$0xff]
          %v352 = vld [vmem:[#allocation6 + $0x8] sm:$0xff]
          %v353 = vld [vmem:[#allocation6 + $0x10] sm:$0xff]
          %v354 = vld [vmem:[#allocation6 + $0x18] sm:$0xff]
          %v355 = vld [vmem:[#allocation6 + $0x20] sm:$0xff]
          %v356 = vld [vmem:[#allocation6 + $0x28] sm:$0xff]
          %v357 = vld [vmem:[#allocation6 + $0x30] sm:$0xff]
          %v358 = vld [vmem:[#allocation6 + $0x38] sm:$0xff]
          %v359 = vld [vmem:[#allocation6 + $0x40] sm:$0xff]
          %v360 = vld [vmem:[#allocation6 + $0x48] sm:$0xff]
          %v361 = vld [vmem:[#allocation6 + $0x50] sm:$0xff]
          %v362 = vld [vmem:[#allocation6 + $0x58] sm:$0xff]
          %v363 = vld [vmem:[#allocation6 + $0x60] sm:$0xff]
          %v364 = vld [vmem:[#allocation6 + $0x68] sm:$0xff]
          %v365 = vld [vmem:[#allocation6 + $0x70] sm:$0xff]
          %v366 = vld [vmem:[#allocation6 + $0x78] sm:$0xff]
          %v367 = vld [vmem:[%s2] sm:$0x1]
          %v369 = vperm.slane %v367, 0
          %371 = vmatpush.msra.mxu0 %v366
          %372 = vmatpush.msra.mxu0 %v365
          %373 = vmatpush.msra.mxu0 %v364
          %374 = vmatpush.msra.mxu0 %v363
          %375 = vmatpush.msra.mxu0 %v362
          %376 = vmatpush.msra.mxu0 %v361
          %377 = vmatpush.msra.mxu0 %v360
          %378 = vmatpush.msra.mxu0 %v359
          %379 = vmatpush.msra.mxu0 %v358
          %380 = vmatpush.msra.mxu0 %v357
          %381 = vmatpush.msra.mxu0 %v356
          %382 = vmatpush.msra.mxu0 %v355
          %383 = vmatpush.msra.mxu0 %v354
          %384 = vmatpush.msra.mxu0 %v353
          %385 = vmatpush.msra.mxu0 %v352
          %386 = vmatpush.msra.mxu0 %v351
          %387 = vmatmul.f32.gmra.mxu0 %v350
          %v388 = vpop.f32.mrf.mxu0
          %v389 = vadd.f32 %v369, %v388
          %390 = vdwg.mxu0
          %391 = vst [vmem:[#allocation2] sm:$0xff] %v389
        $region68: #{tpu_custom_call.1} parent=47 // pred_fallthru
          _
        %v392 = vld [vmem:[#allocation2] sm:$0xff]
        %v393 = vrot.slane %v392, 4
        %v394 = vadd.f32 %v392, %v393
        %v395 = vrot.slane %v394, 2
        %v396 = vadd.f32 %v394, %v395
        %v397 = vrot.slane %v396, 1
        %v398 = vadd.f32 %v396, %v397
        %v399 = vmul.f32 %v398, 0.125
        %v400 = vsub.f32 %v392, %v399
        %v401 = vmul.f32 %v400, %v400
        %v402 = vrot.slane %v401, 4
        %v403 = vadd.f32 %v401, %v402
        %v404 = vrot.slane %v403, 2
        %v405 = vadd.f32 %v403, %v404
        %v406 = vrot.slane %v405, 1
        %v407 = vadd.f32 %v405, %v406
        %v408 = vmul.f32 %v407, 0.125
        %v409 = vrsqrt.pop %v408
        %v410 = vmul.f32 %v409, %v408
        %v411 = vmul.f32 %v410, %v409
        %v412 = vmul.f32 0.5, %v411
        %v413 = vsub.f32 1.5, %v412
        %v414 = vmul.f32 %v409, %v413
        %v415 = vmul.f32 %v408, %v414
        %vm416 = vcmp.eq.f32.partialorder %v408, inf
        %v417 = vsel %vm416, %v408, %v415
        %vm418 = vcmp.eq.f32.partialorder %v408, 0.0
        %v419 = vand.u32 %v408, 2147483648
        %v420 = vsel %vm418, %v419, %v417
        %v421 = vadd.f32 %v420, 1e-06
        %v422 = vrcp.pop %v421
        %v423 = vmul.f32 %v421, %v422
        %v424 = vsub.f32 1.0, %v423
        %v425 = vmul.f32 %v422, %v424
        %v426 = vadd.f32 %v422, %v425
        %vm427 = vweird.f32 %v421
        %vm428 = vweird.f32 %v422
        %vm429 = vmor %vm427, %vm428
        %v430 = vsel %vm429, %v422, %v426
        %v431 = vand.u32 2147483647, %v421
        %vm432 = vcmp.eq.f32.partialorder %v431, 8.507059e+37
        %v433 = vand.u32 %v421, 2147483648
        %v434 = vor.u32 1.1754944e-38, %v433
        %v435 = vsel %vm432, %v434, %v430
        %v436 = vmul.f32 1.0, %v435
        %v437 = vlog2.pop %v436
        %v438 = vmul.f32 %v437, 0.6931472
        %v439 = vrcp.pop 3.0
        %v440 = vmul.f32 3.0, %v439
        %v441 = vsub.f32 1.0, %v440
        %v442 = vmul.f32 %v439, %v441
        %v443 = vadd.f32 %v439, %v442
        %vm444 = vweird.f32 %v439
        %v445 = vsel %vm444, %v439, %v443
        %v446 = vmul.f32 %v438, %v445
        %v447 = vmax.f32 %v446, -5.0
        %v448 = vmin.f32 %v447, 5.0
        %v449 = vmul.f32 %v448, 1.442695
        %v450 = vpow.pop %v449
        %v451 = vmul.f32 %v400, %v450
        %v452 = vmax.f32 %v451, 0.0
        %v453 = vld [vmem:[%s308] sm:$0xff]
        %v454 = vld [vmem:[%s308 + $0x8] sm:$0xff]
        %v455 = vld [vmem:[%s308 + $0x10] sm:$0xff]
        %v456 = vld [vmem:[%s308 + $0x18] sm:$0xff]
        %v457 = vld [vmem:[%s308 + $0x20] sm:$0xff]
        %v458 = vld [vmem:[%s308 + $0x28] sm:$0xff]
        %v459 = vld [vmem:[%s308 + $0x30] sm:$0xff]
        %v460 = vld [vmem:[%s308 + $0x38] sm:$0xff]
        %v461 = vld [vmem:[%s308 + $0x40] sm:$0xff]
        %v462 = vld [vmem:[%s308 + $0x48] sm:$0xff]
        %v463 = vld [vmem:[%s308 + $0x50] sm:$0xff]
        %v464 = vld [vmem:[%s308 + $0x58] sm:$0xff]
        %v465 = vld [vmem:[%s308 + $0x60] sm:$0xff]
        %v466 = vld [vmem:[%s308 + $0x68] sm:$0xff]
        %v467 = vld [vmem:[%s308 + $0x70] sm:$0xff]
        %v468 = vld [vmem:[%s308 + $0x78] sm:$0xff]
        %v469 = vld [vmem:[%s345] sm:$0x1]
        %v471 = vperm.slane %v469, 0
        %473 = vmatpush.msra.mxu0 %v468
        %474 = vmatpush.msra.mxu0 %v467
        %475 = vmatpush.msra.mxu0 %v466
        %476 = vmatpush.msra.mxu0 %v465
        %477 = vmatpush.msra.mxu0 %v464
        %478 = vmatpush.msra.mxu0 %v463
        %479 = vmatpush.msra.mxu0 %v462
        %480 = vmatpush.msra.mxu0 %v461
        %481 = vmatpush.msra.mxu0 %v460
        %482 = vmatpush.msra.mxu0 %v459
        %483 = vmatpush.msra.mxu0 %v458
        %484 = vmatpush.msra.mxu0 %v457
        %485 = vmatpush.msra.mxu0 %v456
        %486 = vmatpush.msra.mxu0 %v455
        %487 = vmatpush.msra.mxu0 %v454
        %488 = vmatpush.msra.mxu0 %v453
        %489 = vmatmul.f32.gmra.mxu0 %v452
        %v490 = vpop.f32.mrf.mxu0
        %v491 = vadd.f32 %v471, %v490
        %492 = vdwg.mxu0
        %v493 = vadd.f32 %v392, %v491
        %494 = vst [vmem:[#allocation2] sm:$0xff] %v493
        %p495 = scmp.eq.s32.totalorder %s21, 1
        // Predicated region
        $region69: #{tpu_custom_call.1} parent=47 // pred_check
          %p496 = pneg %p495
        $region70: #{tpu_custom_call.1} parent=47 // pred_check_branch
          %498 = sbr.rel (%p496) target = $region72
        $region71: #{tpu_custom_call.1} parent=47 // pred_region
          %v499 = vrot.slane %v493, 4
          %v500 = vadd.f32 %v493, %v499
          %v501 = vrot.slane %v500, 2
          %v502 = vadd.f32 %v500, %v501
          %v503 = vrot.slane %v502, 1
          %v504 = vadd.f32 %v502, %v503
          %v505 = vmul.f32 %v504, 0.125
          %v506 = vsub.f32 %v493, %v505
          %v507 = vmul.f32 %v506, %v506
          %v508 = vrot.slane %v507, 4
          %v509 = vadd.f32 %v507, %v508
          %v510 = vrot.slane %v509, 2
          %v511 = vadd.f32 %v509, %v510
          %v512 = vrot.slane %v511, 1
          %v513 = vadd.f32 %v511, %v512
          %v514 = vmul.f32 %v513, 0.125
          %v515 = vrsqrt.pop %v514
          %v516 = vmul.f32 %v515, %v514
          %v517 = vmul.f32 %v516, %v515
          %v518 = vmul.f32 0.5, %v517
          %v519 = vsub.f32 1.5, %v518
          %v520 = vmul.f32 %v515, %v519
          %v521 = vmul.f32 %v514, %v520
          %vm522 = vcmp.eq.f32.partialorder %v514, inf
          %v523 = vsel %vm522, %v514, %v521
          %vm524 = vcmp.eq.f32.partialorder %v514, 0.0
          %v525 = vand.u32 %v514, 2147483648
          %v526 = vsel %vm524, %v525, %v523
          %v527 = vadd.f32 %v526, 1e-06
          %v528 = vrcp.pop %v527
          %v529 = vmul.f32 %v527, %v528
          %v530 = vsub.f32 1.0, %v529
          %v531 = vmul.f32 %v528, %v530
          %v532 = vadd.f32 %v528, %v531
          %vm533 = vweird.f32 %v527
          %vm534 = vweird.f32 %v528
          %vm535 = vmor %vm533, %vm534
          %v536 = vsel %vm535, %v528, %v532
          %v537 = vand.u32 2147483647, %v527
          %vm538 = vcmp.eq.f32.partialorder %v537, 8.507059e+37
          %v539 = vand.u32 %v527, 2147483648
          %v540 = vor.u32 1.1754944e-38, %v539
          %v541 = vsel %vm538, %v540, %v536
          %v542 = vmul.f32 1.0, %v541
          %v543 = vlog2.pop %v542
          %v544 = vmul.f32 %v543, 0.6931472
          %v545 = vmul.f32 %v544, %v445
          %v546 = vmax.f32 %v545, -5.0
          %v547 = vmin.f32 %v546, 5.0
          %v548 = vmul.f32 %v547, 1.442695
          %v549 = vpow.pop %v548
          %v550 = vmul.f32 %v506, %v549
          %v551 = vmax.f32 %v550, 0.0
          %v552 = vld [vmem:[#allocation9] sm:$0xff]
          %v553 = vld [vmem:[#allocation9 + $0x8] sm:$0xff]
          %v554 = vld [vmem:[#allocation9 + $0x10] sm:$0xff]
          %v555 = vld [vmem:[#allocation9 + $0x18] sm:$0xff]
          %v556 = vld [vmem:[#allocation9 + $0x20] sm:$0xff]
          %v557 = vld [vmem:[#allocation9 + $0x28] sm:$0xff]
          %v558 = vld [vmem:[#allocation9 + $0x30] sm:$0xff]
          %v559 = vld [vmem:[#allocation9 + $0x38] sm:$0xff]
          %v560 = vld [vmem:[#allocation9 + $0x40] sm:$0xff]
          %v561 = vld [vmem:[#allocation9 + $0x48] sm:$0xff]
          %v562 = vld [vmem:[#allocation9 + $0x50] sm:$0xff]
          %v563 = vld [vmem:[#allocation9 + $0x58] sm:$0xff]
          %v564 = vld [vmem:[#allocation9 + $0x60] sm:$0xff]
          %v565 = vld [vmem:[#allocation9 + $0x68] sm:$0xff]
          %v566 = vld [vmem:[#allocation9 + $0x70] sm:$0xff]
          %v567 = vld [vmem:[#allocation9 + $0x78] sm:$0xff]
          %v568 = vld [vmem:[%s6] sm:$0x1]
          %v570 = vperm.slane %v568, 0
          %572 = vmatpush.msra.mxu0 %v567
          %573 = vmatpush.msra.mxu0 %v566
          %574 = vmatpush.msra.mxu0 %v565
          %575 = vmatpush.msra.mxu0 %v564
          %576 = vmatpush.msra.mxu0 %v563
          %577 = vmatpush.msra.mxu0 %v562
          %578 = vmatpush.msra.mxu0 %v561
          %579 = vmatpush.msra.mxu0 %v560
          %580 = vmatpush.msra.mxu0 %v559
          %581 = vmatpush.msra.mxu0 %v558
          %582 = vmatpush.msra.mxu0 %v557
          %583 = vmatpush.msra.mxu0 %v556
          %584 = vmatpush.msra.mxu0 %v555
          %585 = vmatpush.msra.mxu0 %v554
          %586 = vmatpush.msra.mxu0 %v553
          %587 = vmatpush.msra.mxu0 %v552
          %588 = vmatmul.f32.gmra.mxu0 %v551
          %v589 = vpop.f32.mrf.mxu0
          %v590 = vadd.f32 %v570, %v589
          %591 = vdwg.mxu0
          %v592 = vlaneseq
          %v593 = vand.u32 %v592, 127
          %vm594 = vcmp.ge.s32.totalorder %v593, 4
          %vm595 = vcmp.lt.s32.totalorder %v593, 8
          %vm596 = vmand %vm594, %vm595
          %v597 = vmul.f32 %v590, 1.442695
          %v598 = vpow.pop %v597
          %v599 = vadd.f32 %v598, 1e-06
          %v600 = vsel %vm596, %v599, %v590
          %601 = vst [vmem:[#allocation10] sm:$0xff] %v600
        $region72: #{tpu_custom_call.1} parent=47 // pred_fallthru
          _
        // Predicated region
        $region73: #{tpu_custom_call.1} parent=47 // pred_check
          %p602 = pneg %p191
        $region74: #{tpu_custom_call.1} parent=47 // pred_check_branch
          %604 = sbr.rel (%p602) target = $region76
        $region75: #{tpu_custom_call.1} parent=47 // pred_region
          %606 = vsyncadd [#allocation5], 0
          %s608 = sshll.u32 [#allocation10], 4
          %s609 = int_to_ptr.vmem [resolvable:$true] %s608
          %s610 = sshll.u32 %s7, 4
          %s611 = int_to_ptr.hbm [resolvable:$true] %s610
          %613 = dma.vmem_to_hbm [thread:$0]  %s609, 128, %s611, [#allocation5]
        $region76: #{tpu_custom_call.1} parent=47 // pred_fallthru
          _
        // Predicated region
        $region77: #{tpu_custom_call.1} parent=47 // pred_check
          %p614 = pneg %p191
        $region78: #{tpu_custom_call.1} parent=47 // pred_check_branch
          %616 = sbr.rel (%p614) target = $region80
        $region79: #{tpu_custom_call.1} parent=47 // pred_region
          %618 = dma.done [#allocation5], 128
        $region80: #{tpu_custom_call.1} parent=47 // pred_fallthru
          _
      $region48: #{tpu_custom_call.1} parent=5 // pred_fallthru
        _
      %p619 = scmp.le.s32.totalorder 2, %s16
      // Predicated region
      $region81: #{tpu_custom_call.1} parent=5 // pred_check
        %p620 = pneg %p619
      $region82: #{tpu_custom_call.1} parent=5 // pred_check_branch
        %622 = sbr.rel (%p620) target = $region84
      $region83: #{tpu_custom_call.1} parent=5 // pred_region
        %s623 = ssub.s32 %s16, 2
      $region84: #{tpu_custom_call.1} parent=5 // pred_fallthru
        _
    $region6: #{tpu_custom_call.1} parent=1 // loop_footer
      %s20 = sadd.s32 1, %s16
    $region7: #{tpu_custom_call.1} parent=1 // loop_footer_branch
      %15 = sbr.rel target = $region3
    $region8: #{tpu_custom_call.1} parent=1 // loop_exit
      _
    %624 = vsyncpa [#allocation4], 1
    %s625 = scalar_lea.sflag [#allocation4], 1
    %626 = vsyncpa %s625, 1
    %627 = vsyncpa [#allocation7], 1
    %628 = vsyncpa [#allocation5], 1
    %s629 = scalar_lea.sflag [#allocation5], 1
    %630 = vsyncpa %s629, 1

</llo_original>
